<compile_context>
chip_gen: v7x
topology: tpu7x:2x2x1
jax: 0.10.0
libtpu: 0.0.40
codegen_flags: <defaults>
</compile_context>

<pallas_src>
import math

import jax
import jax.numpy as jnp
from jax.experimental import pallas as pl
from jax.experimental.pallas import tpu as pltpu


def _add_pe_kernel(x_ref, pe_ref, o_ref):
    # x_ref : (TB, TC) activation tile
    # pe_ref: (1,  TC) positional-embedding tile, broadcast over rows (batch)
    o_ref[...] = (x_ref[...] + pe_ref[...]).astype(o_ref.dtype)


def make_sinusoidal_pe(d_model: int, max_seq_len: int) -> jnp.ndarray:
    """Build the (1, max_seq_len, d_model) non-learnable PE buffer (plain JAX glue)."""
    position = jnp.arange(max_seq_len, dtype=jnp.float32)[:, None]           # (L, 1)
    div_term = jnp.exp(
        jnp.arange(0, d_model, 2, dtype=jnp.float32) * (-math.log(10000.0) / d_model)
    )                                                                          # (ceil(D/2),)
    pe = jnp.zeros((max_seq_len, d_model), dtype=jnp.float32)
    pe = pe.at[:, 0::2].set(jnp.sin(position * div_term))
    if d_model % 2 == 0:
        pe = pe.at[:, 1::2].set(jnp.cos(position * div_term))
    else:
        pe = pe.at[:, 1::2].set(jnp.cos(position * div_term[:-1]))
    return pe[None]                                                            # (1, L, D)


def _largest_aligned_divisor(total: int, target: int, align: int) -> int:
    """Largest multiple of `align` dividing `total` that is <= target.

    Falls back to `total` (full-extent block, always legal for the TPU
    (8, 128) tiling rule) when total is small or not alignable.
    """
    if total <= target or total % align != 0:
        return total
    t = (min(total, target) // align) * align
    while t >= align:
        if total % t == 0:
            return t
        t -= align
    return total


def positional_embedding_forward(x: jnp.ndarray, pe: jnp.ndarray,
                                 dropout_p: float = 0.0) -> jnp.ndarray:
    """x: (B, S, D).  pe: (1, max_seq_len, D).  Returns x + pe[:, :S]."""
    if dropout_p != 0.0:
        # TODO(synk): in-kernel training-mode dropout via pltpu.prng_* if ever needed.
        raise NotImplementedError("dropout_p > 0 not supported (module default is 0.0)")

    B, S, D = x.shape
    # Static slice + dtype match (avoid implicit f32 upcast for bf16 activations).
    pe_s = pe[:, :S, :].astype(x.dtype)

    # Lane-dense 2-D layout: rows = batch, cols = S*D.  PE broadcasts only
    # across batch, so it flattens to a single (1, S*D) row reused per batch.
    C = S * D
    x2 = x.reshape(B, C)
    pe2 = pe_s.reshape(1, C)

    itemsize = jnp.dtype(x.dtype).itemsize

    # Row tile: multiple of 8 sublanes when possible, else full batch extent.
    tb = 8 if (B >= 8 and B % 8 == 0) else B
    # Column tile: largest multiple of 128 lanes dividing C, ~2 MiB per block.
    target_cols = max(128, (2 * 1024 * 1024) // max(1, tb * itemsize))
    tc = _largest_aligned_divisor(C, target_cols, 128)

    n_row = pl.cdiv(B, tb)
    n_col = pl.cdiv(C, tc)

    out2 = pl.pallas_call(
        _add_pe_kernel,
        out_shape=jax.ShapeDtypeStruct((B, C), x.dtype),
        grid_spec=pl.GridSpec(
            grid=(n_col, n_row),                               # rows innermost
            in_specs=[
                pl.BlockSpec((tb, tc), lambda c, r: (r, c)),   # x tile
                pl.BlockSpec((1, tc), lambda c, r: (0, c)),    # pe tile: constant
            ],                                                 #   across inner axis
            out_specs=pl.BlockSpec((tb, tc), lambda c, r: (r, c)),
        ),
        compiler_params=pltpu.CompilerParams(
            dimension_semantics=("parallel", "parallel"),
            # Blocks are sized to fit every generation's default scoped VMEM;
            # cap kept explicit and conservative (safe on v7x's 64 MiB VMEM).
            vmem_limit_bytes=32 * 1024 * 1024,
        ),
    )(x2, pe2)

    return out2.reshape(B, S, D)


if __name__ == "__main__":
    # Small shapes consistent with the module's forward: (batch, seq_len, d_model).
    # (At this size a fused XLA add is already optimal; the kernel pays off at
    #  production S*D sizes — we still run it here to validate the Pallas path.)
    batch, seq_len, d_model, max_seq_len = 2, 8, 32, 64

    key = jax.random.PRNGKey(0)
    x = jax.random.normal(key, (batch, seq_len, d_model), dtype=jnp.float32)

    pe = make_sinusoidal_pe(d_model, max_seq_len)  # deterministic "buffer" init

    out = positional_embedding_forward(x, pe, dropout_p=0.0)
    out = jax.block_until_ready(out)

    # Reference check (pure JAX) against the PyTorch forward semantics.
    ref = x + pe[:, :seq_len]
    assert out.shape == (batch, seq_len, d_model)
    assert jnp.allclose(out, ref, atol=1e-6, rtol=1e-6)

    print("KERNEL_OK")
</pallas_src>

<mosaic_0001>
module attributes {stable_mosaic.version = 11 : i64} {
  func.func @_add_pe_kernel(%arg0: i32, %arg1: i32, %arg2: memref<2x256xf32, #tpu.memory_space<vmem>>, %arg3: memref<1x256xf32, #tpu.memory_space<vmem>>, %arg4: memref<2x256xf32, #tpu.memory_space<vmem>>) attributes {dimension_semantics = [#tpu.dimension_semantics<parallel>, #tpu.dimension_semantics<parallel>], iteration_bounds = array<i64: 1, 1>, scalar_prefetch = 0 : i64, scratch_operands = 0 : i64, tpu.core_type = #tpu.core_type<tc>, window_params = [{transform_indices = @transform_0, window_bounds = array<i64: 2, 256>}, {transform_indices = @transform_1, window_bounds = array<i64: 1, 256>}, {transform_indices = @transform_2, window_bounds = array<i64: 2, 256>}]} {
    %c0 = arith.constant 0 : index
    %c0_0 = arith.constant 0 : index
    %0 = vector.load %arg2[%c0, %c0_0] : memref<2x256xf32, #tpu.memory_space<vmem>>, vector<2x256xf32>
    %c0_1 = arith.constant 0 : index
    %c0_2 = arith.constant 0 : index
    %1 = vector.load %arg3[%c0_1, %c0_2] : memref<1x256xf32, #tpu.memory_space<vmem>>, vector<1x256xf32>
    %2 = vector.broadcast %1 : vector<1x256xf32> to vector<2x256xf32>
    %3 = arith.addf %0, %2 : vector<2x256xf32>
    %c0_3 = arith.constant 0 : index
    %c0_4 = arith.constant 0 : index
    %4 = vector.load %arg4[%c0_3, %c0_4] : memref<2x256xf32, #tpu.memory_space<vmem>>, vector<2x256xf32>
    tpu.vector_store %arg4[%c0_3, %c0_4], %3 {strides = array<i32>} : memref<2x256xf32, #tpu.memory_space<vmem>>, vector<2x256xf32>,
    return
  }
  func.func @transform_0(%arg0: i32, %arg1: i32) -> (i32, i32) {
    %c0_i32 = arith.constant 0 : i32
    return %arg1, %arg0 : i32, i32
  }
  func.func @transform_1(%arg0: i32, %arg1: i32) -> (i32, i32) {
    %c0_i32 = arith.constant 0 : i32
    %c0_i32_0 = arith.constant 0 : i32
    return %c0_i32, %arg0 : i32, i32
  }
  func.func @transform_2(%arg0: i32, %arg1: i32) -> (i32, i32) {
    %c0_i32 = arith.constant 0 : i32
    return %arg1, %arg0 : i32, i32
  }
}

</mosaic_0001>

<llo_original>
// kernel: tpu_custom_call.1
$region0: #{tpu_custom_call.1}
  #allocation0 [shape = 'u32[]', space=smem, size = 0x4, offset = 0x4, fixed_abs, tag = 'smem constant byte address 0x4 - core index']
  #allocation1 [shape = 'u32[144,128]{1,0:T(1,128)}', space=vmem, size = 0x12000, scoped, tag = 'internal scratch']
  %s0 = inlined_call_operand.hbm [shape: f32[2,256], index: 0, kind: input, shape index: {}]
  %s1 = inlined_call_operand.vmem [shape: f32[1,256], index: 1, kind: input, shape index: {}]
  %s2 = inlined_call_operand.hbm [shape: f32[2,256], index: 2, kind: output, shape index: {}]
  %s3 = sld [smem:[#allocation0]]
  $region22: #{tpu_custom_call.1} parent=0
    _
  %s5 = ssub.s32 1, %s3
  %s6 = scalar_select 0, %s5, %s3
  $region1: #{tpu_custom_call.1} parent=0
    #allocation2 [shape = 'u8[2048]{0}', space=vmem, size = 0x800, scoped, tag = 'input window, operand 0, single buffered']
    #allocation3 [shape = 's32[1]{0}', space=sflag, size = 0x4, scoped, tag = 'scoped memory for tpu_custom_call.1']
    #allocation4 [shape = 's32[1]{0}', space=sflag, size = 0x4, scoped, tag = 'scoped memory for tpu_custom_call.1']
    #allocation5 [shape = 'u8[2048]{0}', space=vmem, size = 0x800, scoped, tag = 'output window, operand 0, single buffered']
    %7 = vsyncpa [#allocation3], 0
    %8 = vsyncpa [#allocation4], 0
    // Predicated region
    $region2: #{tpu_custom_call.1} parent=1 // pred_check
      _
    $region3: #{tpu_custom_call.1} parent=1 // pred_check_branch
      %10 = sbr.rel (0) target = $region5
    $region4: #{tpu_custom_call.1} parent=1 // pred_region
      %s12 = ssub.s32 64, 64
      %13 = vsyncadd [#allocation3], %s12
      %s15 = sshll.u32 [#allocation2], 4
      %s16 = int_to_ptr.vmem [resolvable:$true] %s15
      %18 = dma.hbm_to_vmem [thread:$0]  %s0, 64, %s16, [#allocation3]
    $region5: #{tpu_custom_call.1} parent=1 // pred_fallthru
      _
    // Predicated region
    $region6: #{tpu_custom_call.1} parent=1 // pred_check
      _
    $region7: #{tpu_custom_call.1} parent=1 // pred_check_branch
      %20 = sbr.rel (0) target = $region9
    $region8: #{tpu_custom_call.1} parent=1 // pred_region
      _
    $region9: #{tpu_custom_call.1} parent=1 // pred_fallthru
      _
    // Predicated region
    $region10: #{tpu_custom_call.1} parent=1 // pred_check
      _
    $region11: #{tpu_custom_call.1} parent=1 // pred_check_branch
      %22 = sbr.rel (0) target = $region13
    $region12: #{tpu_custom_call.1} parent=1 // pred_region
      %23 = dma.done [#allocation3], 64
    $region13: #{tpu_custom_call.1} parent=1 // pred_fallthru
      _
    %v24 = vld [vmem:[#allocation2] sm:$0xf]
    %v25 = vld [vmem:[%s1] sm:$0x3]
    %v27 = vlaneseq
    %v28 = vshrl.u32 %v27, 7
    %v29 = vsub.s32 0, %v28
    %v30 = vrot.slane %v25, %v29
    %v31 = vlaneseq
    %v32 = vshrl.u32 %v31, 7
    %v33 = vsub.s32 1, %v32
    %v34 = vrot.slane %v25, %v33
    %v35 = vcombine.low %v30, %v34
    %v37 = vunpack.c.l.s4 1983009808
    %v38 = vunpack.c.0.s8 %v37
    %v39 = vlaneseq
    %v40 = vshrl.u32 %v39, 7
    %v41 = vsub.s32 %v38, %v40
    %v42 = vrot.slane %v35, %v41
    %v44 = vadd.f32 %v24, %v42
    %45 = vst [vmem:[#allocation5] sm:$0xf] %v44
    // Predicated region
    $region14: #{tpu_custom_call.1} parent=1 // pred_check
      _
    $region15: #{tpu_custom_call.1} parent=1 // pred_check_branch
      %47 = sbr.rel (0) target = $region17
    $region16: #{tpu_custom_call.1} parent=1 // pred_region
      %s49 = ssub.s32 64, 64
      %50 = vsyncadd [#allocation4], %s49
      %s52 = sshll.u32 [#allocation5], 4
      %s53 = int_to_ptr.vmem [resolvable:$true] %s52
      %55 = dma.vmem_to_hbm [thread:$0]  %s53, 64, %s2, [#allocation4]
    $region17: #{tpu_custom_call.1} parent=1 // pred_fallthru
      _
    // Predicated region
    $region18: #{tpu_custom_call.1} parent=1 // pred_check
      _
    $region19: #{tpu_custom_call.1} parent=1 // pred_check_branch
      %57 = sbr.rel (0) target = $region21
    $region20: #{tpu_custom_call.1} parent=1 // pred_region
      %58 = dma.done [#allocation4], 64
    $region21: #{tpu_custom_call.1} parent=1 // pred_fallthru
      _
    %59 = vsyncpa [#allocation3], 1
    %60 = vsyncpa [#allocation4], 1

</llo_original>
